<compile_context>
chip_gen: v5e
topology: v5e:2x2
jax: 0.10.0
libtpu: 0.0.40
codegen_flags: <defaults>
</compile_context>

<pallas_src>
import functools

import jax
import jax.numpy as jnp
from jax import lax
from jax.experimental import pallas as pl
from jax.experimental.pallas import tpu as pltpu


def _round_up(x: int, m: int) -> int:
    return (x + m - 1) // m * m


def prepare_chaotic_ode_params(w1, b1, w2, b2):
    """One-time layout prep (amortised over all RHS evals / solver steps).

    PyTorch Linear weights are (out, in); transpose to (in, out) so the kernel
    does a plain `x @ W` MXU matmul with no per-step transpose.
    """
    return (jnp.asarray(w1).T,                  # (in_features, hidden)
            jnp.asarray(b1).reshape(1, -1),     # (1, hidden)
            jnp.asarray(w2).T,                  # (hidden, out_features)
            jnp.asarray(b2).reshape(1, -1))     # (1, out_features)


def _mlp(x, w1_ref, b1_ref, w2_ref, b2_ref, mxu_dtype):
    """tanh(relu(x @ W1 + b1) @ W2 + b2).

    Matmul operands optionally cast to mxu_dtype (bf16 path on v6e/v7x);
    accumulation, biases, ReLU and tanh always stay f32 (v5e VPU/EUP have no bf16).
    """
    w1 = w1_ref[...]
    w2 = w2_ref[...]
    if mxu_dtype is not None:
        x, w1, w2 = (a.astype(mxu_dtype) for a in (x, w1, w2))
    h = jnp.dot(x, w1, preferred_element_type=jnp.float32) + b1_ref[...]
    h = jnp.maximum(h, 0.0)
    if mxu_dtype is not None:
        h = h.astype(mxu_dtype)
    y = jnp.dot(h, w2, preferred_element_type=jnp.float32) + b2_ref[...]
    return jnp.tanh(y)


def _rhs_kernel(x_ref, w1_ref, b1_ref, w2_ref, b2_ref, o_ref, *, mxu_dtype):
    o_ref[...] = _mlp(x_ref[...].astype(jnp.float32),
                      w1_ref, b1_ref, w2_ref, b2_ref,
                      mxu_dtype).astype(o_ref.dtype)


def _euler_kernel(x_ref, w1_ref, b1_ref, w2_ref, b2_ref, o_ref, *,
                  num_steps, dt, mxu_dtype):
    # Fused solver time-loop: weights stay VMEM-resident, state stays in vregs.
    def body(_, x):
        return x + dt * _mlp(x, w1_ref, b1_ref, w2_ref, b2_ref, mxu_dtype)

    x0 = x_ref[...].astype(jnp.float32)
    o_ref[...] = lax.fori_loop(0, num_steps, body, x0).astype(o_ref.dtype)


def _batch_tiling(B: int, batch_tile: int):
    """Pick (tile, padded_batch). Small B: one full-batch block (no padding,
    block == full dim satisfies the layout rule). B >= 16: >= 2 sublane-aligned
    tiles so v7x's two TensorCores both get work."""
    if B < 16:
        return B, B
    tb = min(batch_tile, _round_up((B + 1) // 2, 8))
    return tb, _round_up(B, tb)


def _specs(tb, in_f, hid, out_f):
    in_specs = [
        pl.BlockSpec((tb, in_f), lambda i: (i, 0)),     # x tile
        pl.BlockSpec((in_f, hid), lambda i: (0, 0)),    # W1^T (VMEM-resident)
        pl.BlockSpec((1, hid), lambda i: (0, 0)),       # b1
        pl.BlockSpec((hid, out_f), lambda i: (0, 0)),   # W2^T (VMEM-resident)
        pl.BlockSpec((1, out_f), lambda i: (0, 0)),     # b2
    ]
    out_spec = pl.BlockSpec((tb, out_f), lambda i: (i, 0))
    return in_specs, out_spec


def _launch(kernel_fn, x, params, cost, batch_tile):
    w1t, b1, w2t, b2 = params
    B, in_f = x.shape
    hid = w1t.shape[1]
    out_f = w2t.shape[1]
    tb, b_p = _batch_tiling(B, batch_tile)
    x_in = x if b_p == B else jnp.pad(x, ((0, b_p - B), (0, 0)))
    in_specs, out_spec = _specs(tb, in_f, hid, out_f)

    out = pl.pallas_call(
        kernel_fn,
        out_shape=jax.ShapeDtypeStruct((b_p, out_f), x.dtype),
        grid_spec=pltpu.PrefetchScalarGridSpec(
            num_scalar_prefetch=0,
            grid=(b_p // tb,),
            in_specs=in_specs,
            out_specs=out_spec,
        ),
        compiler_params=pltpu.CompilerParams(
            dimension_semantics=("parallel",),
        ),
        cost_estimate=cost,
    )(x_in, w1t, b1, w2t, b2)
    return out if b_p == B else out[:B]


def chaotic_ode_func(t, x, params, *, batch_tile=256, mxu_dtype=None):
    """Module-parity single RHS eval: tanh(relu(x @ W1.T + b1) @ W2.T + b2).

    `params` comes from prepare_chaotic_ode_params (weights pre-transposed once).
    """
    del t  # time-independent ODE function (kept for solver parity)
    w1t, _, w2t, _ = params
    B, in_f = x.shape
    hid, out_f = w1t.shape[1], w2t.shape[1]
    cost = pl.CostEstimate(
        flops=2 * B * in_f * hid + 2 * B * hid * out_f,
        transcendentals=B * out_f,
        bytes_accessed=4 * (B * in_f + in_f * hid + hid
                            + hid * out_f + out_f + B * out_f),
    )
    return _launch(functools.partial(_rhs_kernel, mxu_dtype=mxu_dtype),
                   x, params, cost, batch_tile)


def chaotic_ode_integrate(x0, params, *, num_steps, dt,
                          batch_tile=256, mxu_dtype=None):
    """Fused explicit-Euler integration of the ODE: num_steps steps of size dt
    in a single pallas_call (weights loaded into VMEM exactly once).

    # TODO(synk): higher-order solvers (RK4) can reuse the same in-kernel loop;
    # only explicit Euler is provided here.
    """
    w1t, _, w2t, _ = params
    B, in_f = x0.shape
    hid, out_f = w1t.shape[1], w2t.shape[1]
    assert out_f == in_f, "time integration requires out_features == in_features"
    cost = pl.CostEstimate(
        flops=num_steps * (2 * B * in_f * hid + 2 * B * hid * out_f),
        transcendentals=num_steps * B * out_f,
        bytes_accessed=4 * (B * in_f + in_f * hid + hid
                            + hid * out_f + out_f + B * out_f),
    )
    kernel_fn = functools.partial(_euler_kernel, num_steps=num_steps,
                                  dt=float(dt), mxu_dtype=mxu_dtype)
    return _launch(kernel_fn, x0, params, cost, batch_tile)


if __name__ == "__main__":
    # Module config: Linear(in, hidden) -> ReLU -> Linear(hidden, out) -> Tanh
    in_features = 32
    hidden_size = 64
    out_features = 32
    batch = 8

    key = jax.random.PRNGKey(0)
    k_x, k_w1, k_b1, k_w2, k_b2 = jax.random.split(key, 5)

    # PyTorch Linear weight layout: (out, in).
    w1 = jax.random.normal(k_w1, (hidden_size, in_features), jnp.float32) * 0.1
    b1 = jax.random.normal(k_b1, (hidden_size,), jnp.float32) * 0.1
    w2 = jax.random.normal(k_w2, (out_features, hidden_size), jnp.float32) * 0.1
    b2 = jax.random.normal(k_b2, (out_features,), jnp.float32) * 0.1
    x = jax.random.normal(k_x, (batch, in_features), jnp.float32)
    t = jnp.float32(0.0)

    params = prepare_chaotic_ode_params(w1, b1, w2, b2)

    # 1) Single RHS evaluation (== ChaoticODEFunc.forward(t, x)).
    out = jax.block_until_ready(chaotic_ode_func(t, x, params))
    ref = jnp.tanh(jnp.maximum(x @ w1.T + b1, 0.0) @ w2.T + b2)
    assert out.shape == (batch, out_features)
    assert jnp.allclose(out, ref, atol=1e-5, rtol=1e-5)

    # 2) Fused solver time-loop: one kernel launch for the whole trajectory.
    num_steps, dt = 64, 1e-2
    traj = jax.block_until_ready(
        chaotic_ode_integrate(x, params, num_steps=num_steps, dt=dt))

    def euler_ref(x0):
        def body(_, xc):
            return xc + dt * jnp.tanh(
                jnp.maximum(xc @ w1.T + b1, 0.0) @ w2.T + b2)
        return lax.fori_loop(0, num_steps, body, x0)

    ref_traj = euler_ref(x)
    assert traj.shape == (batch, in_features)
    assert jnp.allclose(traj, ref_traj, atol=1e-4, rtol=1e-4)

    print("KERNEL_OK")
</pallas_src>

<mosaic_0001>
module attributes {stable_mosaic.version = 11 : i64} {
  func.func @_rhs_kernel(%arg0: i32, %arg1: memref<8x32xf32, #tpu.memory_space<vmem>>, %arg2: memref<32x64xf32, #tpu.memory_space<vmem>>, %arg3: memref<1x64xf32, #tpu.memory_space<vmem>>, %arg4: memref<64x32xf32, #tpu.memory_space<vmem>>, %arg5: memref<1x32xf32, #tpu.memory_space<vmem>>, %arg6: memref<8x32xf32, #tpu.memory_space<vmem>>) attributes {dimension_semantics = [#tpu.dimension_semantics<parallel>], iteration_bounds = array<i64: 1>, scalar_prefetch = 0 : i64, scratch_operands = 0 : i64, tpu.core_type = #tpu.core_type<tc>, window_params = [{transform_indices = @transform_0, window_bounds = array<i64: 8, 32>}, {pipeline_mode = #tpu.pipeline_mode<synchronous>, transform_indices = @transform_1, window_bounds = array<i64: 32, 64>}, {pipeline_mode = #tpu.pipeline_mode<synchronous>, transform_indices = @transform_2, window_bounds = array<i64: 1, 64>}, {pipeline_mode = #tpu.pipeline_mode<synchronous>, transform_indices = @transform_3, window_bounds = array<i64: 64, 32>}, {pipeline_mode = #tpu.pipeline_mode<synchronous>, transform_indices = @transform_4, window_bounds = array<i64: 1, 32>}, {transform_indices = @transform_5, window_bounds = array<i64: 8, 32>}]} {
    %c0 = arith.constant 0 : index
    %c0_0 = arith.constant 0 : index
    %0 = vector.load %arg1[%c0, %c0_0] : memref<8x32xf32, #tpu.memory_space<vmem>>, vector<8x32xf32>
    %c0_1 = arith.constant 0 : index
    %c0_2 = arith.constant 0 : index
    %1 = vector.load %arg2[%c0_1, %c0_2] : memref<32x64xf32, #tpu.memory_space<vmem>>, vector<32x64xf32>
    %c0_3 = arith.constant 0 : index
    %c0_4 = arith.constant 0 : index
    %2 = vector.load %arg4[%c0_3, %c0_4] : memref<64x32xf32, #tpu.memory_space<vmem>>, vector<64x32xf32>
    %cst = arith.constant dense<0.000000e+00> : vector<8x64xf32>
    %3 = tpu.matmul %0, %1, %cst {dimension_numbers = #tpu.dot_dimension_numbers<[1], [0], [0], [1], [0, 0, 1, 1], [], []>} : vector<8x32xf32>, vector<32x64xf32>, vector<8x64xf32> -> vector<8x64xf32>
    %c0_5 = arith.constant 0 : index
    %c0_6 = arith.constant 0 : index
    %4 = vector.load %arg3[%c0_5, %c0_6] : memref<1x64xf32, #tpu.memory_space<vmem>>, vector<1x64xf32>
    %5 = vector.broadcast %4 : vector<1x64xf32> to vector<8x64xf32>
    %6 = arith.addf %3, %5 : vector<8x64xf32>
    %cst_7 = arith.constant 0.000000e+00 : f32
    %7 = vector.broadcast %cst_7 : f32 to vector<8x64xf32>
    %8 = arith.maximumf %6, %7 : vector<8x64xf32>
    %cst_8 = arith.constant dense<0.000000e+00> : vector<8x32xf32>
    %9 = tpu.matmul %8, %2, %cst_8 {dimension_numbers = #tpu.dot_dimension_numbers<[1], [0], [0], [1], [0, 0, 1, 1], [], []>} : vector<8x64xf32>, vector<64x32xf32>, vector<8x32xf32> -> vector<8x32xf32>
    %c0_9 = arith.constant 0 : index
    %c0_10 = arith.constant 0 : index
    %10 = vector.load %arg5[%c0_9, %c0_10] : memref<1x32xf32, #tpu.memory_space<vmem>>, vector<1x32xf32>
    %11 = vector.broadcast %10 : vector<1x32xf32> to vector<8x32xf32>
    %12 = arith.addf %9, %11 : vector<8x32xf32>
    %13 = math.tanh %12 : vector<8x32xf32>
    %c0_11 = arith.constant 0 : index
    %c0_12 = arith.constant 0 : index
    %14 = vector.load %arg6[%c0_11, %c0_12] : memref<8x32xf32, #tpu.memory_space<vmem>>, vector<8x32xf32>
    tpu.vector_store %arg6[%c0_11, %c0_12], %13 {strides = array<i32>} : memref<8x32xf32, #tpu.memory_space<vmem>>, vector<8x32xf32>,
    return
  }
  func.func @transform_0(%arg0: i32) -> (i32, i32) {
    %c0_i32 = arith.constant 0 : i32
    %c0_i32_0 = arith.constant 0 : i32
    return %arg0, %c0_i32 : i32, i32
  }
  func.func @transform_1(%arg0: i32) -> (i32, i32) {
    %c0_i32 = arith.constant 0 : i32
    %c0_i32_0 = arith.constant 0 : i32
    %c0_i32_1 = arith.constant 0 : i32
    return %c0_i32, %c0_i32_0 : i32, i32
  }
  func.func @transform_2(%arg0: i32) -> (i32, i32) {
    %c0_i32 = arith.constant 0 : i32
    %c0_i32_0 = arith.constant 0 : i32
    %c0_i32_1 = arith.constant 0 : i32
    return %c0_i32, %c0_i32_0 : i32, i32
  }
  func.func @transform_3(%arg0: i32) -> (i32, i32) {
    %c0_i32 = arith.constant 0 : i32
    %c0_i32_0 = arith.constant 0 : i32
    %c0_i32_1 = arith.constant 0 : i32
    return %c0_i32, %c0_i32_0 : i32, i32
  }
  func.func @transform_4(%arg0: i32) -> (i32, i32) {
    %c0_i32 = arith.constant 0 : i32
    %c0_i32_0 = arith.constant 0 : i32
    %c0_i32_1 = arith.constant 0 : i32
    return %c0_i32, %c0_i32_0 : i32, i32
  }
  func.func @transform_5(%arg0: i32) -> (i32, i32) {
    %c0_i32 = arith.constant 0 : i32
    %c0_i32_0 = arith.constant 0 : i32
    return %arg0, %c0_i32 : i32, i32
  }
}

</mosaic_0001>

<llo_original>
// kernel: tpu_custom_call.1
$region0: #{tpu_custom_call.1}
  #allocation0 [shape = 'u32[]', space=smem, size = 0x4, offset = 0x4, fixed_abs, tag = 'smem constant byte address 0x4 - core index']
  #allocation1 [shape = 'u32[72,128]{1,0:T(1,128)}', space=vmem, size = 0x9000, scoped, tag = 'internal scratch']
  %s0 = inlined_call_operand.vmem [shape: f32[8,32], index: 0, kind: input, shape index: {}]
  %s1 = inlined_call_operand.vmem [shape: f32[32,64], index: 1, kind: input, shape index: {}]
  %s2 = inlined_call_operand.vmem [shape: f32[1,64], index: 2, kind: input, shape index: {}]
  %s3 = inlined_call_operand.vmem [shape: f32[64,32], index: 3, kind: input, shape index: {}]
  %s4 = inlined_call_operand.vmem [shape: f32[1,32], index: 4, kind: input, shape index: {}]
  %s5 = inlined_call_operand.hbm [shape: f32[8,32], index: 5, kind: output, shape index: {}]
  %s6 = sld [smem:[#allocation0]]
  $region30: #{tpu_custom_call.1} parent=0
    _
  %s8 = ssub.s32 1, %s6
  %s9 = scalar_select 0, %s8, %s6
  $region1: #{tpu_custom_call.1} parent=0
    #allocation2 [shape = 'u8[4096]{0}', space=vmem, size = 0x1000, scoped, tag = 'output window, operand 0, single buffered']
    #allocation3 [shape = 's32[1]{0}', space=sflag, size = 0x4, scoped, tag = 'scoped memory for tpu_custom_call.1']
    %10 = vsyncpa [#allocation3], 0
    // Predicated region
    $region2: #{tpu_custom_call.1} parent=1 // pred_check
      _
    $region3: #{tpu_custom_call.1} parent=1 // pred_check_branch
      %12 = sbr.rel (0) target = $region5
    $region4: #{tpu_custom_call.1} parent=1 // pred_region
      _
    $region5: #{tpu_custom_call.1} parent=1 // pred_fallthru
      _
    // Predicated region
    $region6: #{tpu_custom_call.1} parent=1 // pred_check
      _
    $region7: #{tpu_custom_call.1} parent=1 // pred_check_branch
      %14 = sbr.rel (0) target = $region9
    $region8: #{tpu_custom_call.1} parent=1 // pred_region
      _
    $region9: #{tpu_custom_call.1} parent=1 // pred_fallthru
      _
    // Predicated region
    $region10: #{tpu_custom_call.1} parent=1 // pred_check
      _
    $region11: #{tpu_custom_call.1} parent=1 // pred_check_branch
      %16 = sbr.rel (0) target = $region13
    $region12: #{tpu_custom_call.1} parent=1 // pred_region
      _
    $region13: #{tpu_custom_call.1} parent=1 // pred_fallthru
      _
    // Predicated region
    $region14: #{tpu_custom_call.1} parent=1 // pred_check
      _
    $region15: #{tpu_custom_call.1} parent=1 // pred_check_branch
      %18 = sbr.rel (0) target = $region17
    $region16: #{tpu_custom_call.1} parent=1 // pred_region
      _
    $region17: #{tpu_custom_call.1} parent=1 // pred_fallthru
      _
    // Predicated region
    $region18: #{tpu_custom_call.1} parent=1 // pred_check
      _
    $region19: #{tpu_custom_call.1} parent=1 // pred_check_branch
      %20 = sbr.rel (0) target = $region21
    $region20: #{tpu_custom_call.1} parent=1 // pred_region
      _
    $region21: #{tpu_custom_call.1} parent=1 // pred_fallthru
      _
    %v21 = vld [vmem:[%s0] sm:$0xff]
    %v22 = vld [vmem:[%s1] sm:$0xff]
    %v23 = vld [vmem:[%s1 + $0x8] sm:$0xff]
    %v24 = vld [vmem:[%s1 + $0x10] sm:$0xff]
    %v25 = vld [vmem:[%s1 + $0x18] sm:$0xff]
    %v26 = vld [vmem:[%s3] sm:$0xff]
    %v27 = vld [vmem:[%s3 + $0x8] sm:$0xff]
    %v28 = vld [vmem:[%s3 + $0x10] sm:$0xff]
    %v29 = vld [vmem:[%s3 + $0x18] sm:$0xff]
    %v30 = vld [vmem:[%s3 + $0x20] sm:$0xff]
    %v31 = vld [vmem:[%s3 + $0x28] sm:$0xff]
    %v32 = vld [vmem:[%s3 + $0x30] sm:$0xff]
    %v33 = vld [vmem:[%s3 + $0x38] sm:$0xff]
    %v34 = vld [vmem:[%s2] sm:$0x1]
    %v36 = vperm.slane %v34, 0
    %vm38 = vcmask 261120
    %v40 = vsel %vm38, %v21, 0
    %42 = vmatpush.msra.mxu0 0.0
    %43 = vmatpush.msra.mxu0 0.0
    %44 = vmatpush.msra.mxu0 0.0
    %45 = vmatpush.msra.mxu0 0.0
    %46 = vmatpush.msra.mxu0 0.0
    %47 = vmatpush.msra.mxu0 0.0
    %48 = vmatpush.msra.mxu0 0.0
    %49 = vmatpush.msra.mxu0 0.0
    %50 = vmatpush.msra.mxu0 0.0
    %51 = vmatpush.msra.mxu0 0.0
    %52 = vmatpush.msra.mxu0 0.0
    %53 = vmatpush.msra.mxu0 0.0
    %54 = vmatpush.msra.mxu0 %v25
    %55 = vmatpush.msra.mxu0 %v24
    %56 = vmatpush.msra.mxu0 %v23
    %57 = vmatpush.msra.mxu0 %v22
    %58 = vmatmul.f32.gmra.mxu0 %v40
    %v59 = vpop.f32.mrf.mxu0
    %v60 = vadd.f32 %v36, %v59
    %61 = vdwg.mxu0
    %v62 = vmax.f32 %v60, 0.0
    %v63 = vld [vmem:[%s4] sm:$0x1]
    %v65 = vperm.slane %v63, 0
    %vm67 = vcmask 523264
    %v69 = vsel %vm67, %v62, 0
    %71 = vmatpush.msra.mxu0 0.0
    %72 = vmatpush.msra.mxu0 0.0
    %73 = vmatpush.msra.mxu0 0.0
    %74 = vmatpush.msra.mxu0 0.0
    %75 = vmatpush.msra.mxu0 0.0
    %76 = vmatpush.msra.mxu0 0.0
    %77 = vmatpush.msra.mxu0 0.0
    %78 = vmatpush.msra.mxu0 0.0
    %79 = vmatpush.msra.mxu0 %v33
    %80 = vmatpush.msra.mxu0 %v32
    %81 = vmatpush.msra.mxu0 %v31
    %82 = vmatpush.msra.mxu0 %v30
    %83 = vmatpush.msra.mxu0 %v29
    %84 = vmatpush.msra.mxu0 %v28
    %85 = vmatpush.msra.mxu0 %v27
    %86 = vmatpush.msra.mxu0 %v26
    %87 = vmatmul.f32.gmra.mxu0 %v69
    %v88 = vpop.f32.mrf.mxu0
    %v89 = vadd.f32 %v65, %v88
    %90 = vdwg.mxu0
    %v91 = vtanh.pop %v89
    %92 = vst.msk [vmem:[#allocation2] sm:$0xff] %vm38, %v91
    // Predicated region
    $region22: #{tpu_custom_call.1} parent=1 // pred_check
      _
    $region23: #{tpu_custom_call.1} parent=1 // pred_check_branch
      %94 = sbr.rel (0) target = $region25
    $region24: #{tpu_custom_call.1} parent=1 // pred_region
      %96 = vsyncadd [#allocation3], 0
      %s98 = sshll.u32 [#allocation2], 4
      %s99 = int_to_ptr.vmem [resolvable:$true] %s98
      %s100 = sshll.u32 %s5, 4
      %s101 = int_to_ptr.hbm [resolvable:$true] %s100
      %103 = dma.vmem_to_hbm [thread:$0]  %s99, 128, %s101, [#allocation3]
    $region25: #{tpu_custom_call.1} parent=1 // pred_fallthru
      _
    // Predicated region
    $region26: #{tpu_custom_call.1} parent=1 // pred_check
      _
    $region27: #{tpu_custom_call.1} parent=1 // pred_check_branch
      %105 = sbr.rel (0) target = $region29
    $region28: #{tpu_custom_call.1} parent=1 // pred_region
      %107 = dma.done [#allocation3], 128
    $region29: #{tpu_custom_call.1} parent=1 // pred_fallthru
      _
    %108 = vsyncpa [#allocation3], 1

</llo_original>
